<compile_context>
chip_gen: v7x
topology: tpu7x:2x2x1
jax: 0.10.0
libtpu: 0.0.40
codegen_flags: <defaults>
</compile_context>

<pallas_src>
import functools

import jax
import jax.numpy as jnp
from jax import lax
from jax.experimental import pallas as pl
from jax.experimental.pallas import tpu as pltpu


def _round_up(n, m):
    return -(-n // m) * m


# -----------------------------------------------------------------------------
# Pallas kernel: fused im2row-GEMM conv with bias / ReLU / residual epilogue
# -----------------------------------------------------------------------------
def _conv_gemm_kernel(*refs, relu_main, add_res, relu_out):
    # refs = (patches, w, b[, res], out)
    if add_res:
        patches_ref, w_ref, b_ref, res_ref, o_ref = refs
    else:
        patches_ref, w_ref, b_ref, o_ref = refs
        res_ref = None

    # (Op, CKp) @ (CKp, nblk) on the MXU, f32 accumulation.
    acc = jnp.dot(w_ref[...], patches_ref[...],
                  preferred_element_type=jnp.float32)
    acc = acc + b_ref[...]                     # (Op, 1) broadcast over lanes
    if relu_main:
        acc = jnp.maximum(acc, 0.0)
    if add_res:
        acc = acc + res_ref[...].astype(jnp.float32)
    if relu_out:
        acc = jnp.maximum(acc, 0.0)
    o_ref[...] = acc.astype(o_ref.dtype)       # single unmasked lane-dense store


# -----------------------------------------------------------------------------
# Wrapper: layout plumbing (im2row in (C*K, N) order) + pallas_call
# -----------------------------------------------------------------------------
def conv2d_gemm_cbhw(x_cb, w_comb, bias, *, KH, KW, stride=1, dilation=1,
                     pad_top=0, pad_bottom=0, pad_left=0, pad_right=0,
                     relu_main=False, res_cb=None, relu_out=False,
                     lane_block=512):
    """Fused conv on channel-major activations.

    x_cb:   (C, B, H, W)   channel-major activation.
    w_comb: (O, C*KH*KW)   f32, row order c*KH*KW + kh*KW + kw.
    bias:   (O,)           f32.
    res_cb: optional (O, B, OH, OW) residual, added after the main-path ReLU.
    Returns (O, B, OH, OW).
    """
    assert lane_block % 128 == 0
    C, B, H, W = x_cb.shape
    O, CK = w_comb.shape
    K = KH * KW
    assert CK == C * K

    OH = (H + pad_top + pad_bottom - dilation * (KH - 1) - 1) // stride + 1
    OW = (W + pad_left + pad_right - dilation * (KW - 1) - 1) // stride + 1
    N = B * OH * OW

    # ---- wrapper-side layout plumbing (no compute hoisted) ----
    xp = jnp.pad(x_cb, ((0, 0), (0, 0), (pad_top, pad_bottom),
                        (pad_left, pad_right)))
    taps = []
    for kh in range(KH):
        for kw in range(KW):
            h0, w0 = kh * dilation, kw * dilation
            taps.append(lax.slice(
                xp, (0, 0, h0, w0),
                (C, B, h0 + (OH - 1) * stride + 1, w0 + (OW - 1) * stride + 1),
                (1, 1, stride, stride)))                     # (C, B, OH, OW)
    # Taps stack right after the channel axis -> rows are already c*K + k;
    # no transpose of the K-times-expanded slab is needed.
    patches = jnp.stack(taps, axis=1).reshape(CK, N)

    # Pad rows to a sublane multiple and lanes to a whole number of blocks.
    nblk = min(lane_block, _round_up(N, 128))
    NP = _round_up(N, nblk)
    CKp = _round_up(CK, 8)
    Op = _round_up(O, 8)
    patches = jnp.pad(patches, ((0, CKp - CK), (0, NP - N)))
    w_p = jnp.pad(w_comb.astype(jnp.float32), ((0, Op - O), (0, CKp - CK)))
    b_p = jnp.pad(bias.astype(jnp.float32), (0, Op - O)).reshape(Op, 1)

    inputs = [patches, w_p, b_p]
    in_specs = [
        pl.BlockSpec((CKp, nblk), lambda j: (0, j)),
        pl.BlockSpec((Op, CKp), lambda j: (0, 0)),
        pl.BlockSpec((Op, 1), lambda j: (0, 0)),
    ]
    add_res = res_cb is not None
    if add_res:
        assert res_cb.shape == (O, B, OH, OW), (res_cb.shape, (O, B, OH, OW))
        res_flat = res_cb.reshape(O, N).astype(jnp.float32)
        res_flat = jnp.pad(res_flat, ((0, Op - O), (0, NP - N)))
        inputs.append(res_flat)
        in_specs.append(pl.BlockSpec((Op, nblk), lambda j: (0, j)))

    kernel = functools.partial(_conv_gemm_kernel, relu_main=relu_main,
                               add_res=add_res, relu_out=relu_out)
    out_flat = pl.pallas_call(
        kernel,
        out_shape=jax.ShapeDtypeStruct((Op, NP), x_cb.dtype),
        grid=(NP // nblk,),
        in_specs=in_specs,
        out_specs=pl.BlockSpec((Op, nblk), lambda j: (0, j)),
        compiler_params=pltpu.CompilerParams(
            dimension_semantics=("parallel",)),
    )(*inputs)

    return out_flat[:O, :N].reshape(O, B, OH, OW)


# -----------------------------------------------------------------------------
# Conv front-ends (Pallas and pure-JAX reference), same channel-major interface
# -----------------------------------------------------------------------------
def _fold_weights(conv_params, C, K, separable):
    """Fold (depthwise x pointwise) or plain conv weights into (O, C*K)."""
    if separable:
        w_dw = conv_params["w_dw"].reshape(C, K).astype(jnp.float32)
        w_pw = conv_params["w_pw"].reshape(-1, C).astype(jnp.float32)
        O = w_pw.shape[0]
        w_comb = (w_pw[:, :, None] * w_dw[None, :, :]).reshape(O, C * K)
    else:
        w = conv_params["w"].astype(jnp.float32)
        O = w.shape[0]
        w_comb = w.reshape(O, C * K)
    b = conv_params.get("b")
    if b is None:
        b = jnp.zeros((O,), jnp.float32)
    return w_comb, b.astype(jnp.float32)


def pallas_conv(x_cb, conv_params, *, separable, KH, KW, stride=1,
                pad_top=0, pad_bottom=0, pad_left=0, pad_right=0,
                relu_main=False, res_cb=None, relu_out=False):
    C = x_cb.shape[0]
    w_comb, b = _fold_weights(conv_params, C, KH * KW, separable)
    return conv2d_gemm_cbhw(x_cb, w_comb, b, KH=KH, KW=KW, stride=stride,
                            pad_top=pad_top, pad_bottom=pad_bottom,
                            pad_left=pad_left, pad_right=pad_right,
                            relu_main=relu_main, res_cb=res_cb,
                            relu_out=relu_out)


def reference_conv(x_cb, conv_params, *, separable, KH, KW, stride=1,
                   pad_top=0, pad_bottom=0, pad_left=0, pad_right=0,
                   relu_main=False, res_cb=None, relu_out=False):
    """Pure-JAX reference: depthwise+1x1 (separable) or plain NCHW conv."""
    del KH, KW
    x = jnp.transpose(x_cb, (1, 0, 2, 3))                    # NCHW
    pads = [(pad_top, pad_bottom), (pad_left, pad_right)]
    dn = ("NCHW", "OIHW", "NCHW")
    prec = lax.Precision.HIGHEST
    if separable:
        C = x.shape[1]
        h = lax.conv_general_dilated(x, conv_params["w_dw"], (stride, stride),
                                     pads, dimension_numbers=dn,
                                     feature_group_count=C, precision=prec)
        out = lax.conv_general_dilated(h, conv_params["w_pw"], (1, 1),
                                       [(0, 0), (0, 0)], dimension_numbers=dn,
                                       precision=prec)
    else:
        out = lax.conv_general_dilated(x, conv_params["w"], (stride, stride),
                                       pads, dimension_numbers=dn,
                                       precision=prec)
    if conv_params.get("b") is not None:
        out = out + conv_params["b"][None, :, None, None]
    if relu_main:
        out = jnp.maximum(out, 0.0)
    out = jnp.transpose(out, (1, 0, 2, 3))                   # back to CBHW
    if res_cb is not None:
        out = out + res_cb
    if relu_out:
        out = jnp.maximum(out, 0.0)
    return out


# -----------------------------------------------------------------------------
# ScalogramEncoderBlock / ScalogramResidualEncoder composition (shared)
# -----------------------------------------------------------------------------
def encoder_block_forward(x_cb, block_params, cfg, conv_fn, *, relu_out):
    """One ScalogramEncoderBlock on channel-major (C_in, B, H, W) activations."""
    orig = x_cb
    kh1, kw1 = cfg["kernel_size_1"]
    kh2, kw2 = cfg["kernel_size_2"]
    tp1 = cfg["top_padding_1"] or 0
    tp2 = cfg["top_padding_2"] or 0
    p1, p2 = cfg["padding_1"], cfg["padding_2"]
    s1, s2 = cfg["stride_1"], cfg["stride_2"]

    # main conv 1 (+ top zero-pad) with fused ReLU
    h = conv_fn(x_cb, block_params["conv1"], separable=cfg["separable"],
                KH=kh1, KW=kw1, stride=s1,
                pad_top=tp1 + p1, pad_bottom=p1, pad_left=p1, pad_right=p1,
                relu_main=True)

    # static output shape of main conv 2 (needed for the residual crop)
    _, _, H1, W1 = h.shape
    MH = (H1 + tp2 + 2 * p2 - (kh2 - 1) - 1) // s2 + 1
    MW = (W1 + 2 * p2 - (kw2 - 1) - 1) // s2 + 1

    res_cb = None
    if cfg["residual"]:
        res_cb = orig
        stride_pool = s1 * s2 * cfg["pooling_1"] * cfg["pooling_2"]
        # TODO(synk): residual MaxPool2d(stride_pool, ceil_mode=True) not implemented.
        assert stride_pool == 1, "residual MaxPool path not implemented"
        if cfg["in_channels"] != cfg["out_channels"]:
            rp = p1 + p2
            res_cb = conv_fn(res_cb, block_params["res_conv"], separable=False,
                             KH=1, KW=1, stride=1,
                             pad_top=rp, pad_bottom=rp,
                             pad_left=rp, pad_right=rp)
        # crop exactly as the PyTorch block does (shapes are static)
        r_h, r_w = res_cb.shape[2], res_cb.shape[3]
        o_h = (r_h - MH + 1) / 2
        o_w = (r_w - MW + 1) / 2
        if int(o_h) > 0:
            res_cb = res_cb[:, :, -int(o_h + MH):-int(o_h), :]
        if int(o_w) > 0:
            res_cb = res_cb[:, :, :, -int(o_w + MW):-int(o_w)]

    # main conv 2 with fused ReLU + residual add (+ the encoder's inter-block ReLU)
    out = conv_fn(h, block_params["conv2"], separable=cfg["separable"],
                  KH=kh2, KW=kw2, stride=s2,
                  pad_top=tp2 + p2, pad_bottom=p2, pad_left=p2, pad_right=p2,
                  relu_main=True, res_cb=res_cb, relu_out=relu_out)
    return out


def scalogram_encoder_forward(x, params, cfgs, conv_fn):
    """x: (B, C, H, W) or (B, C, W).  Returns (B, C_out, W_out) = x[:, :, 0, :]."""
    if x.ndim == 3:
        x = x[:, :, None, :]
    x_cb = jnp.transpose(x, (1, 0, 2, 3))      # small input -> channel-major once
    n = len(cfgs)
    for i, (bp, cfg) in enumerate(zip(params, cfgs)):
        x_cb = encoder_block_forward(x_cb, bp, cfg, conv_fn,
                                     relu_out=(i < n - 1))
    # NCHW x[:, :, 0, :]  ==  transpose of channel-major x_cb[:, :, 0, :]
    return jnp.transpose(x_cb[:, :, 0, :], (1, 0, 2))


# -----------------------------------------------------------------------------
# Parameter init + test
# -----------------------------------------------------------------------------
def _init_params(key, cfgs):
    def conv_p(k, cin, cout, kh, kw, separable, bias):
        if separable:
            k1, k2, k3 = jax.random.split(k, 3)
            p = {"w_dw": 0.3 * jax.random.normal(k1, (cin, 1, kh, kw), jnp.float32),
                 "w_pw": 0.3 * jax.random.normal(k2, (cout, cin, 1, 1), jnp.float32)}
            if bias:
                p["b"] = 0.1 * jax.random.normal(k3, (cout,), jnp.float32)
        else:
            k1, k2 = jax.random.split(k)
            p = {"w": 0.1 * jax.random.normal(k1, (cout, cin, kh, kw), jnp.float32)}
            if bias:
                p["b"] = 0.1 * jax.random.normal(k2, (cout,), jnp.float32)
        return p

    params = []
    for cfg in cfgs:
        c_in = cfg["in_channels"]
        c_hid = cfg["hidden_channels"] or cfg["out_channels"]
        c_out = cfg["out_channels"]
        kh1, kw1 = cfg["kernel_size_1"]
        kh2, kw2 = cfg["kernel_size_2"]
        key, k1, k2, k3 = jax.random.split(key, 4)
        block = {
            "conv1": conv_p(k1, c_in, c_hid, kh1, kw1, cfg["separable"], cfg["bias"]),
            "conv2": conv_p(k2, c_hid, c_out, kh2, kw2, cfg["separable"], cfg["bias"]),
        }
        if cfg["residual"] and c_in != c_out:
            block["res_conv"] = {
                "w": 0.1 * jax.random.normal(k3, (c_out, c_in, 1, 1), jnp.float32)}
        params.append(block)
    return params


if __name__ == "__main__":
    # Small encoder: block 0 uses Conv2dSeparable (depthwise+1x1 folded into one
    # combined-weight matmul), block 1 uses plain Conv2d with a top zero-pad.
    cfgs = [
        dict(in_channels=4, hidden_channels=8, out_channels=8,
             kernel_size_1=(3, 3), kernel_size_2=(3, 3),
             top_padding_1=None, top_padding_2=None,
             padding_1=0, padding_2=0, stride_1=1, stride_2=1,
             pooling_1=1, pooling_2=1, bias=True,
             separable=True, residual=True, batch_norm=False),
        dict(in_channels=8, hidden_channels=8, out_channels=8,
             kernel_size_1=(3, 3), kernel_size_2=(3, 3),
             top_padding_1=2, top_padding_2=None,
             padding_1=0, padding_2=0, stride_1=1, stride_2=1,
             pooling_1=1, pooling_2=1, bias=True,
             separable=False, residual=True, batch_norm=False),
    ]

    B, C, H, W = 2, 4, 16, 16
    key = jax.random.PRNGKey(0)
    k_x, k_p = jax.random.split(key)
    x = jax.random.normal(k_x, (B, C, H, W), dtype=jnp.float32)
    params = _init_params(k_p, cfgs)

    # Whole encoder forward (all pallas_calls + layout glue) under one jit.
    fwd = jax.jit(functools.partial(scalogram_encoder_forward,
                                    cfgs=cfgs, conv_fn=pallas_conv))
    out = jax.block_until_ready(fwd(x, params))

    ref_fwd = jax.jit(functools.partial(scalogram_encoder_forward,
                                        cfgs=cfgs, conv_fn=reference_conv))
    ref = jax.block_until_ready(ref_fwd(x, params))

    assert out.shape == ref.shape, (out.shape, ref.shape)
    # Tolerance covers possible reduced-precision MXU passes for the f32 matmul.
    max_err = float(jnp.max(jnp.abs(out - ref)))
    assert jnp.allclose(out, ref, atol=2e-3, rtol=2e-3), f"mismatch: {max_err}"

    print("KERNEL_OK")
</pallas_src>

<mosaic_0001>
module attributes {stable_mosaic.version = 11 : i64} {
  func.func @_conv_gemm_kernel(%arg0: i32, %arg1: memref<8x512xf32, #tpu.memory_space<vmem>>, %arg2: memref<8x8xf32, #tpu.memory_space<vmem>>, %arg3: memref<8x1xf32, #tpu.memory_space<vmem>>, %arg4: memref<8x512xf32, #tpu.memory_space<vmem>>) attributes {dimension_semantics = [#tpu.dimension_semantics<parallel>], iteration_bounds = array<i64: 1>, scalar_prefetch = 0 : i64, scratch_operands = 0 : i64, tpu.core_type = #tpu.core_type<tc>, window_params = [{transform_indices = @transform_0, window_bounds = array<i64: 8, 512>}, {pipeline_mode = #tpu.pipeline_mode<synchronous>, transform_indices = @transform_1, window_bounds = array<i64: 8, 8>}, {pipeline_mode = #tpu.pipeline_mode<synchronous>, transform_indices = @transform_2, window_bounds = array<i64: 8, 1>}, {transform_indices = @transform_3, window_bounds = array<i64: 8, 512>}]} {
    %c0 = arith.constant 0 : index
    %c0_0 = arith.constant 0 : index
    %0 = vector.load %arg2[%c0, %c0_0] : memref<8x8xf32, #tpu.memory_space<vmem>>, vector<8x8xf32>
    %c0_1 = arith.constant 0 : index
    %c0_2 = arith.constant 0 : index
    %1 = vector.load %arg1[%c0_1, %c0_2] : memref<8x512xf32, #tpu.memory_space<vmem>>, vector<8x512xf32>
    %cst = arith.constant dense<0.000000e+00> : vector<8x512xf32>
    %2 = tpu.matmul %0, %1, %cst {dimension_numbers = #tpu.dot_dimension_numbers<[1], [0], [0], [1], [0, 0, 1, 1], [], []>} : vector<8x8xf32>, vector<8x512xf32>, vector<8x512xf32> -> vector<8x512xf32>
    %c0_3 = arith.constant 0 : index
    %c0_4 = arith.constant 0 : index
    %3 = vector.load %arg3[%c0_3, %c0_4] : memref<8x1xf32, #tpu.memory_space<vmem>>, vector<8x1xf32>
    %4 = vector.broadcast %3 : vector<8x1xf32> to vector<8x512xf32>
    %5 = arith.addf %2, %4 : vector<8x512xf32>
    %c0_5 = arith.constant 0 : index
    %c0_6 = arith.constant 0 : index
    %6 = vector.load %arg4[%c0_5, %c0_6] : memref<8x512xf32, #tpu.memory_space<vmem>>, vector<8x512xf32>
    tpu.vector_store %arg4[%c0_5, %c0_6], %5 {strides = array<i32>} : memref<8x512xf32, #tpu.memory_space<vmem>>, vector<8x512xf32>,
    return
  }
  func.func @transform_0(%arg0: i32) -> (i32, i32) {
    %c0_i32 = arith.constant 0 : i32
    %c0_i32_0 = arith.constant 0 : i32
    return %c0_i32, %arg0 : i32, i32
  }
  func.func @transform_1(%arg0: i32) -> (i32, i32) {
    %c0_i32 = arith.constant 0 : i32
    %c0_i32_0 = arith.constant 0 : i32
    %c0_i32_1 = arith.constant 0 : i32
    return %c0_i32, %c0_i32_0 : i32, i32
  }
  func.func @transform_2(%arg0: i32) -> (i32, i32) {
    %c0_i32 = arith.constant 0 : i32
    %c0_i32_0 = arith.constant 0 : i32
    %c0_i32_1 = arith.constant 0 : i32
    return %c0_i32, %c0_i32_0 : i32, i32
  }
  func.func @transform_3(%arg0: i32) -> (i32, i32) {
    %c0_i32 = arith.constant 0 : i32
    %c0_i32_0 = arith.constant 0 : i32
    return %c0_i32, %arg0 : i32, i32
  }
}

module attributes {stable_mosaic.version = 11 : i64} {
  func.func @_conv_gemm_kernel(%arg0: i32, %arg1: memref<40x512xf32, #tpu.memory_space<vmem>>, %arg2: memref<8x40xf32, #tpu.memory_space<vmem>>, %arg3: memref<8x1xf32, #tpu.memory_space<vmem>>, %arg4: memref<8x512xf32, #tpu.memory_space<vmem>>) attributes {dimension_semantics = [#tpu.dimension_semantics<parallel>], iteration_bounds = array<i64: 1>, scalar_prefetch = 0 : i64, scratch_operands = 0 : i64, tpu.core_type = #tpu.core_type<tc>, window_params = [{transform_indices = @transform_0, window_bounds = array<i64: 40, 512>}, {pipeline_mode = #tpu.pipeline_mode<synchronous>, transform_indices = @transform_1, window_bounds = array<i64: 8, 40>}, {pipeline_mode = #tpu.pipeline_mode<synchronous>, transform_indices = @transform_2, window_bounds = array<i64: 8, 1>}, {transform_indices = @transform_3, window_bounds = array<i64: 8, 512>}]} {
    %c0 = arith.constant 0 : index
    %c0_0 = arith.constant 0 : index
    %0 = vector.load %arg2[%c0, %c0_0] : memref<8x40xf32, #tpu.memory_space<vmem>>, vector<8x40xf32>
    %c0_1 = arith.constant 0 : index
    %c0_2 = arith.constant 0 : index
    %1 = vector.load %arg1[%c0_1, %c0_2] : memref<40x512xf32, #tpu.memory_space<vmem>>, vector<40x512xf32>
    %cst = arith.constant dense<0.000000e+00> : vector<8x512xf32>
    %2 = tpu.matmul %0, %1, %cst {dimension_numbers = #tpu.dot_dimension_numbers<[1], [0], [0], [1], [0, 0, 1, 1], [], []>} : vector<8x40xf32>, vector<40x512xf32>, vector<8x512xf32> -> vector<8x512xf32>
    %c0_3 = arith.constant 0 : index
    %c0_4 = arith.constant 0 : index
    %3 = vector.load %arg3[%c0_3, %c0_4] : memref<8x1xf32, #tpu.memory_space<vmem>>, vector<8x1xf32>
    %4 = vector.broadcast %3 : vector<8x1xf32> to vector<8x512xf32>
    %5 = arith.addf %2, %4 : vector<8x512xf32>
    %cst_5 = arith.constant 0.000000e+00 : f32
    %6 = vector.broadcast %cst_5 : f32 to vector<8x512xf32>
    %7 = arith.maximumf %5, %6 : vector<8x512xf32>
    %c0_6 = arith.constant 0 : index
    %c0_7 = arith.constant 0 : index
    %8 = vector.load %arg4[%c0_6, %c0_7] : memref<8x512xf32, #tpu.memory_space<vmem>>, vector<8x512xf32>
    tpu.vector_store %arg4[%c0_6, %c0_7], %7 {strides = array<i32>} : memref<8x512xf32, #tpu.memory_space<vmem>>, vector<8x512xf32>,
    return
  }
  func.func @transform_0(%arg0: i32) -> (i32, i32) {
    %c0_i32 = arith.constant 0 : i32
    %c0_i32_0 = arith.constant 0 : i32
    return %c0_i32, %arg0 : i32, i32
  }
  func.func @transform_1(%arg0: i32) -> (i32, i32) {
    %c0_i32 = arith.constant 0 : i32
    %c0_i32_0 = arith.constant 0 : i32
    %c0_i32_1 = arith.constant 0 : i32
    return %c0_i32, %c0_i32_0 : i32, i32
  }
  func.func @transform_2(%arg0: i32) -> (i32, i32) {
    %c0_i32 = arith.constant 0 : i32
    %c0_i32_0 = arith.constant 0 : i32
    %c0_i32_1 = arith.constant 0 : i32
    return %c0_i32, %c0_i32_0 : i32, i32
  }
  func.func @transform_3(%arg0: i32) -> (i32, i32) {
    %c0_i32 = arith.constant 0 : i32
    %c0_i32_0 = arith.constant 0 : i32
    return %c0_i32, %arg0 : i32, i32
  }
}

module attributes {stable_mosaic.version = 11 : i64} {
  func.func @_conv_gemm_kernel(%arg0: i32, %arg1: memref<72x384xf32, #tpu.memory_space<vmem>>, %arg2: memref<8x72xf32, #tpu.memory_space<vmem>>, %arg3: memref<8x1xf32, #tpu.memory_space<vmem>>, %arg4: memref<8x384xf32, #tpu.memory_space<vmem>>, %arg5: memref<8x384xf32, #tpu.memory_space<vmem>>) attributes {dimension_semantics = [#tpu.dimension_semantics<parallel>], iteration_bounds = array<i64: 1>, scalar_prefetch = 0 : i64, scratch_operands = 0 : i64, tpu.core_type = #tpu.core_type<tc>, window_params = [{transform_indices = @transform_0, window_bounds = array<i64: 72, 384>}, {pipeline_mode = #tpu.pipeline_mode<synchronous>, transform_indices = @transform_1, window_bounds = array<i64: 8, 72>}, {pipeline_mode = #tpu.pipeline_mode<synchronous>, transform_indices = @transform_2, window_bounds = array<i64: 8, 1>}, {transform_indices = @transform_3, window_bounds = array<i64: 8, 384>}, {transform_indices = @transform_4, window_bounds = array<i64: 8, 384>}]} {
    %c0 = arith.constant 0 : index
    %c0_0 = arith.constant 0 : index
    %0 = vector.load %arg2[%c0, %c0_0] : memref<8x72xf32, #tpu.memory_space<vmem>>, vector<8x72xf32>
    %c0_1 = arith.constant 0 : index
    %c0_2 = arith.constant 0 : index
    %1 = vector.load %arg1[%c0_1, %c0_2] : memref<72x384xf32, #tpu.memory_space<vmem>>, vector<72x384xf32>
    %cst = arith.constant dense<0.000000e+00> : vector<8x384xf32>
    %2 = tpu.matmul %0, %1, %cst {dimension_numbers = #tpu.dot_dimension_numbers<[1], [0], [0], [1], [0, 0, 1, 1], [], []>} : vector<8x72xf32>, vector<72x384xf32>, vector<8x384xf32> -> vector<8x384xf32>
    %c0_3 = arith.constant 0 : index
    %c0_4 = arith.constant 0 : index
    %3 = vector.load %arg3[%c0_3, %c0_4] : memref<8x1xf32, #tpu.memory_space<vmem>>, vector<8x1xf32>
    %4 = vector.broadcast %3 : vector<8x1xf32> to vector<8x384xf32>
    %5 = arith.addf %2, %4 : vector<8x384xf32>
    %cst_5 = arith.constant 0.000000e+00 : f32
    %6 = vector.broadcast %cst_5 : f32 to vector<8x384xf32>
    %7 = arith.maximumf %5, %6 : vector<8x384xf32>
    %c0_6 = arith.constant 0 : index
    %c0_7 = arith.constant 0 : index
    %8 = vector.load %arg4[%c0_6, %c0_7] : memref<8x384xf32, #tpu.memory_space<vmem>>, vector<8x384xf32>
    %9 = arith.addf %7, %8 : vector<8x384xf32>
    %cst_8 = arith.constant 0.000000e+00 : f32
    %10 = vector.broadcast %cst_8 : f32 to vector<8x384xf32>
    %11 = arith.maximumf %9, %10 : vector<8x384xf32>
    %c0_9 = arith.constant 0 : index
    %c0_10 = arith.constant 0 : index
    %12 = vector.load %arg5[%c0_9, %c0_10] : memref<8x384xf32, #tpu.memory_space<vmem>>, vector<8x384xf32>
    tpu.vector_store %arg5[%c0_9, %c0_10], %11 {strides = array<i32>} : memref<8x384xf32, #tpu.memory_space<vmem>>, vector<8x384xf32>,
    return
  }
  func.func @transform_0(%arg0: i32) -> (i32, i32) {
    %c0_i32 = arith.constant 0 : i32
    %c0_i32_0 = arith.constant 0 : i32
    return %c0_i32, %arg0 : i32, i32
  }
  func.func @transform_1(%arg0: i32) -> (i32, i32) {
    %c0_i32 = arith.constant 0 : i32
    %c0_i32_0 = arith.constant 0 : i32
    %c0_i32_1 = arith.constant 0 : i32
    return %c0_i32, %c0_i32_0 : i32, i32
  }
  func.func @transform_2(%arg0: i32) -> (i32, i32) {
    %c0_i32 = arith.constant 0 : i32
    %c0_i32_0 = arith.constant 0 : i32
    %c0_i32_1 = arith.constant 0 : i32
    return %c0_i32, %c0_i32_0 : i32, i32
  }
  func.func @transform_3(%arg0: i32) -> (i32, i32) {
    %c0_i32 = arith.constant 0 : i32
    %c0_i32_0 = arith.constant 0 : i32
    return %c0_i32, %arg0 : i32, i32
  }
  func.func @transform_4(%arg0: i32) -> (i32, i32) {
    %c0_i32 = arith.constant 0 : i32
    %c0_i32_0 = arith.constant 0 : i32
    return %c0_i32, %arg0 : i32, i32
  }
}

module attributes {stable_mosaic.version = 11 : i64} {
  func.func @_conv_gemm_kernel(%arg0: i32, %arg1: memref<72x256xf32, #tpu.memory_space<vmem>>, %arg2: memref<8x72xf32, #tpu.memory_space<vmem>>, %arg3: memref<8x1xf32, #tpu.memory_space<vmem>>, %arg4: memref<8x256xf32, #tpu.memory_space<vmem>>) attributes {dimension_semantics = [#tpu.dimension_semantics<parallel>], iteration_bounds = array<i64: 1>, scalar_prefetch = 0 : i64, scratch_operands = 0 : i64, tpu.core_type = #tpu.core_type<tc>, window_params = [{transform_indices = @transform_0, window_bounds = array<i64: 72, 256>}, {pipeline_mode = #tpu.pipeline_mode<synchronous>, transform_indices = @transform_1, window_bounds = array<i64: 8, 72>}, {pipeline_mode = #tpu.pipeline_mode<synchronous>, transform_indices = @transform_2, window_bounds = array<i64: 8, 1>}, {transform_indices = @transform_3, window_bounds = array<i64: 8, 256>}]} {
    %c0 = arith.constant 0 : index
    %c0_0 = arith.constant 0 : index
    %0 = vector.load %arg2[%c0, %c0_0] : memref<8x72xf32, #tpu.memory_space<vmem>>, vector<8x72xf32>
    %c0_1 = arith.constant 0 : index
    %c0_2 = arith.constant 0 : index
    %1 = vector.load %arg1[%c0_1, %c0_2] : memref<72x256xf32, #tpu.memory_space<vmem>>, vector<72x256xf32>
    %cst = arith.constant dense<0.000000e+00> : vector<8x256xf32>
    %2 = tpu.matmul %0, %1, %cst {dimension_numbers = #tpu.dot_dimension_numbers<[1], [0], [0], [1], [0, 0, 1, 1], [], []>} : vector<8x72xf32>, vector<72x256xf32>, vector<8x256xf32> -> vector<8x256xf32>
    %c0_3 = arith.constant 0 : index
    %c0_4 = arith.constant 0 : index
    %3 = vector.load %arg3[%c0_3, %c0_4] : memref<8x1xf32, #tpu.memory_space<vmem>>, vector<8x1xf32>
    %4 = vector.broadcast %3 : vector<8x1xf32> to vector<8x256xf32>
    %5 = arith.addf %2, %4 : vector<8x256xf32>
    %cst_5 = arith.constant 0.000000e+00 : f32
    %6 = vector.broadcast %cst_5 : f32 to vector<8x256xf32>
    %7 = arith.maximumf %5, %6 : vector<8x256xf32>
    %c0_6 = arith.constant 0 : index
    %c0_7 = arith.constant 0 : index
    %8 = vector.load %arg4[%c0_6, %c0_7] : memref<8x256xf32, #tpu.memory_space<vmem>>, vector<8x256xf32>
    tpu.vector_store %arg4[%c0_6, %c0_7], %7 {strides = array<i32>} : memref<8x256xf32, #tpu.memory_space<vmem>>, vector<8x256xf32>,
    return
  }
  func.func @transform_0(%arg0: i32) -> (i32, i32) {
    %c0_i32 = arith.constant 0 : i32
    %c0_i32_0 = arith.constant 0 : i32
    return %c0_i32, %arg0 : i32, i32
  }
  func.func @transform_1(%arg0: i32) -> (i32, i32) {
    %c0_i32 = arith.constant 0 : i32
    %c0_i32_0 = arith.constant 0 : i32
    %c0_i32_1 = arith.constant 0 : i32
    return %c0_i32, %c0_i32_0 : i32, i32
  }
  func.func @transform_2(%arg0: i32) -> (i32, i32) {
    %c0_i32 = arith.constant 0 : i32
    %c0_i32_0 = arith.constant 0 : i32
    %c0_i32_1 = arith.constant 0 : i32
    return %c0_i32, %c0_i32_0 : i32, i32
  }
  func.func @transform_3(%arg0: i32) -> (i32, i32) {
    %c0_i32 = arith.constant 0 : i32
    %c0_i32_0 = arith.constant 0 : i32
    return %c0_i32, %arg0 : i32, i32
  }
}

module attributes {stable_mosaic.version = 11 : i64} {
  func.func @_conv_gemm_kernel(%arg0: i32, %arg1: memref<72x256xf32, #tpu.memory_space<vmem>>, %arg2: memref<8x72xf32, #tpu.memory_space<vmem>>, %arg3: memref<8x1xf32, #tpu.memory_space<vmem>>, %arg4: memref<8x256xf32, #tpu.memory_space<vmem>>, %arg5: memref<8x256xf32, #tpu.memory_space<vmem>>) attributes {dimension_semantics = [#tpu.dimension_semantics<parallel>], iteration_bounds = array<i64: 1>, scalar_prefetch = 0 : i64, scratch_operands = 0 : i64, tpu.core_type = #tpu.core_type<tc>, window_params = [{transform_indices = @transform_0, window_bounds = array<i64: 72, 256>}, {pipeline_mode = #tpu.pipeline_mode<synchronous>, transform_indices = @transform_1, window_bounds = array<i64: 8, 72>}, {pipeline_mode = #tpu.pipeline_mode<synchronous>, transform_indices = @transform_2, window_bounds = array<i64: 8, 1>}, {transform_indices = @transform_3, window_bounds = array<i64: 8, 256>}, {transform_indices = @transform_4, window_bounds = array<i64: 8, 256>}]} {
    %c0 = arith.constant 0 : index
    %c0_0 = arith.constant 0 : index
    %0 = vector.load %arg2[%c0, %c0_0] : memref<8x72xf32, #tpu.memory_space<vmem>>, vector<8x72xf32>
    %c0_1 = arith.constant 0 : index
    %c0_2 = arith.constant 0 : index
    %1 = vector.load %arg1[%c0_1, %c0_2] : memref<72x256xf32, #tpu.memory_space<vmem>>, vector<72x256xf32>
    %cst = arith.constant dense<0.000000e+00> : vector<8x256xf32>
    %2 = tpu.matmul %0, %1, %cst {dimension_numbers = #tpu.dot_dimension_numbers<[1], [0], [0], [1], [0, 0, 1, 1], [], []>} : vector<8x72xf32>, vector<72x256xf32>, vector<8x256xf32> -> vector<8x256xf32>
    %c0_3 = arith.constant 0 : index
    %c0_4 = arith.constant 0 : index
    %3 = vector.load %arg3[%c0_3, %c0_4] : memref<8x1xf32, #tpu.memory_space<vmem>>, vector<8x1xf32>
    %4 = vector.broadcast %3 : vector<8x1xf32> to vector<8x256xf32>
    %5 = arith.addf %2, %4 : vector<8x256xf32>
    %cst_5 = arith.constant 0.000000e+00 : f32
    %6 = vector.broadcast %cst_5 : f32 to vector<8x256xf32>
    %7 = arith.maximumf %5, %6 : vector<8x256xf32>
    %c0_6 = arith.constant 0 : index
    %c0_7 = arith.constant 0 : index
    %8 = vector.load %arg4[%c0_6, %c0_7] : memref<8x256xf32, #tpu.memory_space<vmem>>, vector<8x256xf32>
    %9 = arith.addf %7, %8 : vector<8x256xf32>
    %c0_8 = arith.constant 0 : index
    %c0_9 = arith.constant 0 : index
    %10 = vector.load %arg5[%c0_8, %c0_9] : memref<8x256xf32, #tpu.memory_space<vmem>>, vector<8x256xf32>
    tpu.vector_store %arg5[%c0_8, %c0_9], %9 {strides = array<i32>} : memref<8x256xf32, #tpu.memory_space<vmem>>, vector<8x256xf32>,
    return
  }
  func.func @transform_0(%arg0: i32) -> (i32, i32) {
    %c0_i32 = arith.constant 0 : i32
    %c0_i32_0 = arith.constant 0 : i32
    return %c0_i32, %arg0 : i32, i32
  }
  func.func @transform_1(%arg0: i32) -> (i32, i32) {
    %c0_i32 = arith.constant 0 : i32
    %c0_i32_0 = arith.constant 0 : i32
    %c0_i32_1 = arith.constant 0 : i32
    return %c0_i32, %c0_i32_0 : i32, i32
  }
  func.func @transform_2(%arg0: i32) -> (i32, i32) {
    %c0_i32 = arith.constant 0 : i32
    %c0_i32_0 = arith.constant 0 : i32
    %c0_i32_1 = arith.constant 0 : i32
    return %c0_i32, %c0_i32_0 : i32, i32
  }
  func.func @transform_3(%arg0: i32) -> (i32, i32) {
    %c0_i32 = arith.constant 0 : i32
    %c0_i32_0 = arith.constant 0 : i32
    return %c0_i32, %arg0 : i32, i32
  }
  func.func @transform_4(%arg0: i32) -> (i32, i32) {
    %c0_i32 = arith.constant 0 : i32
    %c0_i32_0 = arith.constant 0 : i32
    return %c0_i32, %arg0 : i32, i32
  }
}

</mosaic_0001>

<llo_original>
// kernel: scalogram_encoder_forward.6
$region0: #{scalogram_encoder_forward.6}
  #allocation0 [shape = 'u32[]', space=smem, size = 0x4, offset = 0x4, fixed_abs, tag = 'smem constant byte address 0x4 - core index']
  #allocation1 [shape = 'u32[144,128]{1,0:T(1,128)}', space=vmem, size = 0x12000, scoped, tag = 'internal scratch']
  %s0 = inlined_call_operand.vmem [shape: f32[8,512], index: 0, kind: input, shape index: {}]
  %s1 = inlined_call_operand.vmem [shape: f32[8,8], index: 1, kind: input, shape index: {}]
  %s2 = inlined_call_operand.vmem [shape: f32[8,1], index: 2, kind: input, shape index: {}]
  %s3 = inlined_call_operand.vmem [shape: f32[8,512], index: 3, kind: output, shape index: {}]
  %s4 = sld [smem:[#allocation0]]
  $region22: #{scalogram_encoder_forward.6} parent=0
    _
  %s6 = ssub.s32 1, %s4
  %s7 = scalar_select 0, %s6, %s4
  // Predicated region
  $region2: #{scalogram_encoder_forward.6} parent=0 // pred_check
    _
  $region3: #{scalogram_encoder_forward.6} parent=0 // pred_check_branch
    %9 = sbr.rel (0) target = $region5
  $region4: #{scalogram_encoder_forward.6} parent=0 // pred_region
    _
  $region5: #{scalogram_encoder_forward.6} parent=0 // pred_fallthru
    _
  // Predicated region
  $region6: #{scalogram_encoder_forward.6} parent=0 // pred_check
    _
  $region7: #{scalogram_encoder_forward.6} parent=0 // pred_check_branch
    %11 = sbr.rel (0) target = $region9
  $region8: #{scalogram_encoder_forward.6} parent=0 // pred_region
    _
  $region9: #{scalogram_encoder_forward.6} parent=0 // pred_fallthru
    _
  // Predicated region
  $region10: #{scalogram_encoder_forward.6} parent=0 // pred_check
    _
  $region11: #{scalogram_encoder_forward.6} parent=0 // pred_check_branch
    %13 = sbr.rel (0) target = $region13
  $region12: #{scalogram_encoder_forward.6} parent=0 // pred_region
    _
  $region13: #{scalogram_encoder_forward.6} parent=0 // pred_fallthru
    _
  %v14 = vld [vmem:[%s1] sm:$0xff]
  %v15 = vld [vmem:[%s0] sm:$0xff]
  %v16 = vld [vmem:[%s0 + $0x8] sm:$0xff]
  %v17 = vld [vmem:[%s0 + $0x10] sm:$0xff]
  %v18 = vld [vmem:[%s0 + $0x18] sm:$0xff]
  %v19 = vld [vmem:[%s2] sm:$0xff]
  %21 = vset.pattern.permute.xlu0 0
  %22 = vperm.xlu0 %21, %v19
  %v23 = vpop.permute.xlu0 %22
  %vm25 = vcmask 64512
  %v27 = vsel %vm25, %v14, 0
  %29 = vmatprep.subr.mxu0 %v16
  %30 = vmatpush1.msra.mxu0 %v15
  %31 = vmatprep.subr.mxu0 0.0
  %32 = vmatpush1.msra.mxu0 0.0
  %33 = vmatprep.subr.mxu0 0.0
  %34 = vmatpush1.msra.mxu0 0.0
  %35 = vmatprep.subr.mxu0 0.0
  %36 = vmatpush1.msra.mxu0 0.0
  %37 = vmatprep.subr.mxu0 0.0
  %38 = vmatpush1.msra.mxu0 0.0
  %39 = vmatprep.subr.mxu0 0.0
  %40 = vmatpush1.msra.mxu0 0.0
  %41 = vmatprep.subr.mxu0 0.0
  %42 = vmatpush1.msra.mxu0 0.0
  %43 = vmatprep.subr.mxu0 0.0
  %44 = vmatpush1.msra.mxu0 0.0
  %45 = vmatprep.subr.mxu0 0.0
  %46 = vmatpush1.msra.mxu0 0.0
  %47 = vmatprep.subr.mxu0 0.0
  %48 = vmatpush1.msra.mxu0 0.0
  %49 = vmatprep.subr.mxu0 0.0
  %50 = vmatpush1.msra.mxu0 0.0
  %51 = vmatprep.subr.mxu0 0.0
  %52 = vmatpush1.msra.mxu0 0.0
  %53 = vmatprep.subr.mxu0 0.0
  %54 = vmatpush1.msra.mxu0 0.0
  %55 = vmatprep.subr.mxu0 0.0
  %56 = vmatpush1.msra.mxu0 0.0
  %57 = vmatprep.subr.mxu0 0.0
  %58 = vmatpush1.msra.mxu0 0.0
  %59 = vmatprep.subr.mxu0 0.0
  %60 = vmatpush1.msra.mxu0 0.0
  %61 = vmatprep.subr.mxu0 0.0
  %62 = vmatpush1.msra.mxu0 0.0
  %63 = vmatprep.subr.mxu0 0.0
  %64 = vmatpush1.msra.mxu0 0.0
  %65 = vmatprep.subr.mxu0 0.0
  %66 = vmatpush1.msra.mxu0 0.0
  %67 = vmatprep.subr.mxu0 0.0
  %68 = vmatpush1.msra.mxu0 0.0
  %69 = vmatprep.subr.mxu0 0.0
  %70 = vmatpush1.msra.mxu0 0.0
  %71 = vmatprep.subr.mxu0 0.0
  %72 = vmatpush1.msra.mxu0 0.0
  %73 = vmatprep.subr.mxu0 0.0
  %74 = vmatpush1.msra.mxu0 0.0
  %75 = vmatprep.subr.mxu0 0.0
  %76 = vmatpush1.msra.mxu0 0.0
  %77 = vmatprep.subr.mxu0 0.0
  %78 = vmatpush1.msra.mxu0 0.0
  %79 = vmatprep.subr.mxu0 0.0
  %80 = vmatpush1.msra.mxu0 0.0
  %81 = vmatprep.subr.mxu0 0.0
  %82 = vmatpush1.msra.mxu0 0.0
  %83 = vmatprep.subr.mxu0 0.0
  %84 = vmatpush1.msra.mxu0 0.0
  %85 = vmatprep.subr.mxu0 0.0
  %86 = vmatpush1.msra.mxu0 0.0
  %87 = vmatprep.subr.mxu0 0.0
  %88 = vmatpush1.msra.mxu0 0.0
  %89 = vmatprep.subr.mxu0 0.0
  %90 = vmatpush1.msra.mxu0 0.0
  %91 = vmatprep.subr.mxu0 0.0
  %92 = vmatpush1.msra.mxu0 0.0
  %93 = vmatprep.mubr.f32.mxu0 0.0
  %94 = vmatmul.mubr.f32.gmra.mrb[0].mxu0 %v27
  %v95 = vpop.f32.mrb[0].mxu0
  %v96 = vadd.f32 %v23, %v95
  %v97 = vpop.f32.mrb[0].mxu0
  %v98 = vadd.f32 %v23, %v97
  %99 = vdwg.mxu0
  %100 = vmatprep.subr.mxu0 %v18
  %101 = vmatpush1.msra.mxu0 %v17
  %102 = vmatprep.subr.mxu0 0.0
  %103 = vmatpush1.msra.mxu0 0.0
  %104 = vmatprep.subr.mxu0 0.0
  %105 = vmatpush1.msra.mxu0 0.0
  %106 = vmatprep.subr.mxu0 0.0
  %107 = vmatpush1.msra.mxu0 0.0
  %108 = vmatprep.subr.mxu0 0.0
  %109 = vmatpush1.msra.mxu0 0.0
  %110 = vmatprep.subr.mxu0 0.0
  %111 = vmatpush1.msra.mxu0 0.0
  %112 = vmatprep.subr.mxu0 0.0
  %113 = vmatpush1.msra.mxu0 0.0
  %114 = vmatprep.subr.mxu0 0.0
  %115 = vmatpush1.msra.mxu0 0.0
  %116 = vmatprep.subr.mxu0 0.0
  %117 = vmatpush1.msra.mxu0 0.0
  %118 = vmatprep.subr.mxu0 0.0
  %119 = vmatpush1.msra.mxu0 0.0
  %120 = vmatprep.subr.mxu0 0.0
  %121 = vmatpush1.msra.mxu0 0.0
  %122 = vmatprep.subr.mxu0 0.0
  %123 = vmatpush1.msra.mxu0 0.0
  %124 = vmatprep.subr.mxu0 0.0
  %125 = vmatpush1.msra.mxu0 0.0
  %126 = vmatprep.subr.mxu0 0.0
  %127 = vmatpush1.msra.mxu0 0.0
  %128 = vmatprep.subr.mxu0 0.0
  %129 = vmatpush1.msra.mxu0 0.0
  %130 = vmatprep.subr.mxu0 0.0
  %131 = vmatpush1.msra.mxu0 0.0
  %132 = vmatprep.subr.mxu0 0.0
  %133 = vmatpush1.msra.mxu0 0.0
  %134 = vmatprep.subr.mxu0 0.0
  %135 = vmatpush1.msra.mxu0 0.0
  %136 = vmatprep.subr.mxu0 0.0
  %137 = vmatpush1.msra.mxu0 0.0
  %138 = vmatprep.subr.mxu0 0.0
  %139 = vmatpush1.msra.mxu0 0.0
  %140 = vmatprep.subr.mxu0 0.0
  %141 = vmatpush1.msra.mxu0 0.0
  %142 = vmatprep.subr.mxu0 0.0
  %143 = vmatpush1.msra.mxu0 0.0
  %144 = vmatprep.subr.mxu0 0.0
  %145 = vmatpush1.msra.mxu0 0.0
  %146 = vmatprep.subr.mxu0 0.0
  %147 = vmatpush1.msra.mxu0 0.0
  %148 = vmatprep.subr.mxu0 0.0
  %149 = vmatpush1.msra.mxu0 0.0
  %150 = vmatprep.subr.mxu0 0.0
  %151 = vmatpush1.msra.mxu0 0.0
  %152 = vmatprep.subr.mxu0 0.0
  %153 = vmatpush1.msra.mxu0 0.0
  %154 = vmatprep.subr.mxu0 0.0
  %155 = vmatpush1.msra.mxu0 0.0
  %156 = vmatprep.subr.mxu0 0.0
  %157 = vmatpush1.msra.mxu0 0.0
  %158 = vmatprep.subr.mxu0 0.0
  %159 = vmatpush1.msra.mxu0 0.0
  %160 = vmatprep.subr.mxu0 0.0
  %161 = vmatpush1.msra.mxu0 0.0
  %162 = vmatprep.subr.mxu0 0.0
  %163 = vmatpush1.msra.mxu0 0.0
  %164 = vmatprep.mubr.f32.mxu0 0.0
  %165 = vmatmul.mubr.f32.gmra.mrb[0].mxu0 %v27
  %v166 = vpop.f32.mrb[0].mxu0
  %v167 = vadd.f32 %v23, %v166
  %v168 = vpop.f32.mrb[0].mxu0
  %v169 = vadd.f32 %v23, %v168
  %170 = vdwg.mxu0
  %171 = vst [vmem:[%s3] sm:$0xff] %v96
  %172 = vst [vmem:[%s3 + $0x8] sm:$0xff] %v98
  %173 = vst [vmem:[%s3 + $0x10] sm:$0xff] %v167
  %174 = vst [vmem:[%s3 + $0x18] sm:$0xff] %v169
  // Predicated region
  $region14: #{scalogram_encoder_forward.6} parent=0 // pred_check
    _
  $region15: #{scalogram_encoder_forward.6} parent=0 // pred_check_branch
    %176 = sbr.rel (0) target = $region17
  $region16: #{scalogram_encoder_forward.6} parent=0 // pred_region
    _
  $region17: #{scalogram_encoder_forward.6} parent=0 // pred_fallthru
    _
  // Predicated region
  $region18: #{scalogram_encoder_forward.6} parent=0 // pred_check
    _
  $region19: #{scalogram_encoder_forward.6} parent=0 // pred_check_branch
    %178 = sbr.rel (0) target = $region21
  $region20: #{scalogram_encoder_forward.6} parent=0 // pred_region
    _
  $region21: #{scalogram_encoder_forward.6} parent=0 // pred_fallthru
    _

// kernel: scalogram_encoder_forward.5
$region0: #{scalogram_encoder_forward.5}
  #allocation0 [shape = 'u32[]', space=smem, size = 0x4, offset = 0x4, fixed_abs, tag = 'smem constant byte address 0x4 - core index']
  #allocation1 [shape = 'u32[144,128]{1,0:T(1,128)}', space=vmem, size = 0x12000, scoped, tag = 'internal scratch']
  %s0 = inlined_call_operand.vmem [shape: f32[40,512], index: 0, kind: input, shape index: {}]
  %s1 = inlined_call_operand.vmem [shape: f32[8,40], index: 1, kind: input, shape index: {}]
  %s2 = inlined_call_operand.vmem [shape: f32[8,1], index: 2, kind: input, shape index: {}]
  %s3 = inlined_call_operand.vmem [shape: f32[8,512], index: 3, kind: output, shape index: {}]
  %s4 = sld [smem:[#allocation0]]
  $region22: #{scalogram_encoder_forward.5} parent=0
    _
  %s6 = ssub.s32 1, %s4
  %s7 = scalar_select 0, %s6, %s4
  // Predicated region
  $region2: #{scalogram_encoder_forward.5} parent=0 // pred_check
    _
  $region3: #{scalogram_encoder_forward.5} parent=0 // pred_check_branch
    %9 = sbr.rel (0) target = $region5
  $region4: #{scalogram_encoder_forward.5} parent=0 // pred_region
    _
  $region5: #{scalogram_encoder_forward.5} parent=0 // pred_fallthru
    _
  // Predicated region
  $region6: #{scalogram_encoder_forward.5} parent=0 // pred_check
    _
  $region7: #{scalogram_encoder_forward.5} parent=0 // pred_check_branch
    %11 = sbr.rel (0) target = $region9
  $region8: #{scalogram_encoder_forward.5} parent=0 // pred_region
    _
  $region9: #{scalogram_encoder_forward.5} parent=0 // pred_fallthru
    _
  // Predicated region
  $region10: #{scalogram_encoder_forward.5} parent=0 // pred_check
    _
  $region11: #{scalogram_encoder_forward.5} parent=0 // pred_check_branch
    %13 = sbr.rel (0) target = $region13
  $region12: #{scalogram_encoder_forward.5} parent=0 // pred_region
    _
  $region13: #{scalogram_encoder_forward.5} parent=0 // pred_fallthru
    _
  %v14 = vld [vmem:[%s1] sm:$0xff]
  %v15 = vld [vmem:[%s0] sm:$0xff]
  %v16 = vld [vmem:[%s0 + $0x8] sm:$0xff]
  %v17 = vld [vmem:[%s0 + $0x10] sm:$0xff]
  %v18 = vld [vmem:[%s0 + $0x18] sm:$0xff]
  %v19 = vld [vmem:[%s0 + $0x20] sm:$0xff]
  %v20 = vld [vmem:[%s0 + $0x28] sm:$0xff]
  %v21 = vld [vmem:[%s0 + $0x30] sm:$0xff]
  %v22 = vld [vmem:[%s0 + $0x38] sm:$0xff]
  %v23 = vld [vmem:[%s0 + $0x40] sm:$0xff]
  %v24 = vld [vmem:[%s0 + $0x48] sm:$0xff]
  %v25 = vld [vmem:[%s0 + $0x50] sm:$0xff]
  %v26 = vld [vmem:[%s0 + $0x58] sm:$0xff]
  %v27 = vld [vmem:[%s0 + $0x60] sm:$0xff]
  %v28 = vld [vmem:[%s0 + $0x68] sm:$0xff]
  %v29 = vld [vmem:[%s0 + $0x70] sm:$0xff]
  %v30 = vld [vmem:[%s0 + $0x78] sm:$0xff]
  %v31 = vld [vmem:[%s0 + $0x80] sm:$0xff]
  %v32 = vld [vmem:[%s0 + $0x88] sm:$0xff]
  %v33 = vld [vmem:[%s0 + $0x90] sm:$0xff]
  %v34 = vld [vmem:[%s0 + $0x98] sm:$0xff]
  %v35 = vld [vmem:[%s2] sm:$0xff]
  %37 = vset.pattern.permute.xlu0 0
  %38 = vperm.xlu0 %37, %v35
  %v39 = vpop.permute.xlu0 %38
  %vm41 = vcmask 326656
  %v43 = vsel %vm41, %v14, 0
  %45 = vmatprep.subr.mxu0 %v16
  %46 = vmatpush1.msra.mxu0 %v15
  %47 = vmatprep.subr.mxu0 %v20
  %48 = vmatpush1.msra.mxu0 %v19
  %49 = vmatprep.subr.mxu0 %v24
  %50 = vmatpush1.msra.mxu0 %v23
  %51 = vmatprep.subr.mxu0 %v28
  %52 = vmatpush1.msra.mxu0 %v27
  %53 = vmatprep.subr.mxu0 %v32
  %54 = vmatpush1.msra.mxu0 %v31
  %55 = vmatprep.subr.mxu0 0.0
  %56 = vmatpush1.msra.mxu0 0.0
  %57 = vmatprep.subr.mxu0 0.0
  %58 = vmatpush1.msra.mxu0 0.0
  %59 = vmatprep.subr.mxu0 0.0
  %60 = vmatpush1.msra.mxu0 0.0
  %61 = vmatprep.subr.mxu0 0.0
  %62 = vmatpush1.msra.mxu0 0.0
  %63 = vmatprep.subr.mxu0 0.0
  %64 = vmatpush1.msra.mxu0 0.0
  %65 = vmatprep.subr.mxu0 0.0
  %66 = vmatpush1.msra.mxu0 0.0
  %67 = vmatprep.subr.mxu0 0.0
  %68 = vmatpush1.msra.mxu0 0.0
  %69 = vmatprep.subr.mxu0 0.0
  %70 = vmatpush1.msra.mxu0 0.0
  %71 = vmatprep.subr.mxu0 0.0
  %72 = vmatpush1.msra.mxu0 0.0
  %73 = vmatprep.subr.mxu0 0.0
  %74 = vmatpush1.msra.mxu0 0.0
  %75 = vmatprep.subr.mxu0 0.0
  %76 = vmatpush1.msra.mxu0 0.0
  %77 = vmatprep.subr.mxu0 0.0
  %78 = vmatpush1.msra.mxu0 0.0
  %79 = vmatprep.subr.mxu0 0.0
  %80 = vmatpush1.msra.mxu0 0.0
  %81 = vmatprep.subr.mxu0 0.0
  %82 = vmatpush1.msra.mxu0 0.0
  %83 = vmatprep.subr.mxu0 0.0
  %84 = vmatpush1.msra.mxu0 0.0
  %85 = vmatprep.subr.mxu0 0.0
  %86 = vmatpush1.msra.mxu0 0.0
  %87 = vmatprep.subr.mxu0 0.0
  %88 = vmatpush1.msra.mxu0 0.0
  %89 = vmatprep.subr.mxu0 0.0
  %90 = vmatpush1.msra.mxu0 0.0
  %91 = vmatprep.subr.mxu0 0.0
  %92 = vmatpush1.msra.mxu0 0.0
  %93 = vmatprep.subr.mxu0 0.0
  %94 = vmatpush1.msra.mxu0 0.0
  %95 = vmatprep.subr.mxu0 0.0
  %96 = vmatpush1.msra.mxu0 0.0
  %97 = vmatprep.subr.mxu0 0.0
  %98 = vmatpush1.msra.mxu0 0.0
  %99 = vmatprep.subr.mxu0 0.0
  %100 = vmatpush1.msra.mxu0 0.0
  %101 = vmatprep.subr.mxu0 0.0
  %102 = vmatpush1.msra.mxu0 0.0
  %103 = vmatprep.subr.mxu0 0.0
  %104 = vmatpush1.msra.mxu0 0.0
  %105 = vmatprep.subr.mxu0 0.0
  %106 = vmatpush1.msra.mxu0 0.0
  %107 = vmatprep.subr.mxu0 0.0
  %108 = vmatpush1.msra.mxu0 0.0
  %109 = vmatprep.mubr.f32.mxu0 0.0
  %110 = vmatmul.mubr.f32.gmra.mrb[0].mxu0 %v43
  %v111 = vpop.f32.mrb[0].mxu0
  %v112 = vadd.f32 %v39, %v111
  %v113 = vpop.f32.mrb[0].mxu0
  %v114 = vadd.f32 %v39, %v113
  %115 = vdwg.mxu0
  %116 = vmatprep.subr.mxu0 %v18
  %117 = vmatpush1.msra.mxu0 %v17
  %118 = vmatprep.subr.mxu0 %v22
  %119 = vmatpush1.msra.mxu0 %v21
  %120 = vmatprep.subr.mxu0 %v26
  %121 = vmatpush1.msra.mxu0 %v25
  %122 = vmatprep.subr.mxu0 %v30
  %123 = vmatpush1.msra.mxu0 %v29
  %124 = vmatprep.subr.mxu0 %v34
  %125 = vmatpush1.msra.mxu0 %v33
  %126 = vmatprep.subr.mxu0 0.0
  %127 = vmatpush1.msra.mxu0 0.0
  %128 = vmatprep.subr.mxu0 0.0
  %129 = vmatpush1.msra.mxu0 0.0
  %130 = vmatprep.subr.mxu0 0.0
  %131 = vmatpush1.msra.mxu0 0.0
  %132 = vmatprep.subr.mxu0 0.0
  %133 = vmatpush1.msra.mxu0 0.0
  %134 = vmatprep.subr.mxu0 0.0
  %135 = vmatpush1.msra.mxu0 0.0
  %136 = vmatprep.subr.mxu0 0.0
  %137 = vmatpush1.msra.mxu0 0.0
  %138 = vmatprep.subr.mxu0 0.0
  %139 = vmatpush1.msra.mxu0 0.0
  %140 = vmatprep.subr.mxu0 0.0
  %141 = vmatpush1.msra.mxu0 0.0
  %142 = vmatprep.subr.mxu0 0.0
  %143 = vmatpush1.msra.mxu0 0.0
  %144 = vmatprep.subr.mxu0 0.0
  %145 = vmatpush1.msra.mxu0 0.0
  %146 = vmatprep.subr.mxu0 0.0
  %147 = vmatpush1.msra.mxu0 0.0
  %148 = vmatprep.subr.mxu0 0.0
  %149 = vmatpush1.msra.mxu0 0.0
  %150 = vmatprep.subr.mxu0 0.0
  %151 = vmatpush1.msra.mxu0 0.0
  %152 = vmatprep.subr.mxu0 0.0
  %153 = vmatpush1.msra.mxu0 0.0
  %154 = vmatprep.subr.mxu0 0.0
  %155 = vmatpush1.msra.mxu0 0.0
  %156 = vmatprep.subr.mxu0 0.0
  %157 = vmatpush1.msra.mxu0 0.0
  %158 = vmatprep.subr.mxu0 0.0
  %159 = vmatpush1.msra.mxu0 0.0
  %160 = vmatprep.subr.mxu0 0.0
  %161 = vmatpush1.msra.mxu0 0.0
  %162 = vmatprep.subr.mxu0 0.0
  %163 = vmatpush1.msra.mxu0 0.0
  %164 = vmatprep.subr.mxu0 0.0
  %165 = vmatpush1.msra.mxu0 0.0
  %166 = vmatprep.subr.mxu0 0.0
  %167 = vmatpush1.msra.mxu0 0.0
  %168 = vmatprep.subr.mxu0 0.0
  %169 = vmatpush1.msra.mxu0 0.0
  %170 = vmatprep.subr.mxu0 0.0
  %171 = vmatpush1.msra.mxu0 0.0
  %172 = vmatprep.subr.mxu0 0.0
  %173 = vmatpush1.msra.mxu0 0.0
  %174 = vmatprep.subr.mxu0 0.0
  %175 = vmatpush1.msra.mxu0 0.0
  %176 = vmatprep.subr.mxu0 0.0
  %177 = vmatpush1.msra.mxu0 0.0
  %178 = vmatprep.subr.mxu0 0.0
  %179 = vmatpush1.msra.mxu0 0.0
  %180 = vmatprep.mubr.f32.mxu0 0.0
  %181 = vmatmul.mubr.f32.gmra.mrb[0].mxu0 %v43
  %v182 = vpop.f32.mrb[0].mxu0
  %v183 = vadd.f32 %v39, %v182
  %v184 = vpop.f32.mrb[0].mxu0
  %v185 = vadd.f32 %v39, %v184
  %186 = vdwg.mxu0
  %v187 = vmax.f32 %v112, 0.0
  %v188 = vmax.f32 %v114, 0.0
  %v189 = vmax.f32 %v183, 0.0
  %v190 = vmax.f32 %v185, 0.0
  %191 = vst [vmem:[%s3] sm:$0xff] %v187
  %192 = vst [vmem:[%s3 + $0x8] sm:$0xff] %v188
  %193 = vst [vmem:[%s3 + $0x10] sm:$0xff] %v189
  %194 = vst [vmem:[%s3 + $0x18] sm:$0xff] %v190
  // Predicated region
  $region14: #{scalogram_encoder_forward.5} parent=0 // pred_check
    _
  $region15: #{scalogram_encoder_forward.5} parent=0 // pred_check_branch
    %196 = sbr.rel (0) target = $region17
  $region16: #{scalogram_encoder_forward.5} parent=0 // pred_region
    _
  $region17: #{scalogram_encoder_forward.5} parent=0 // pred_fallthru
    _
  // Predicated region
  $region18: #{scalogram_encoder_forward.5} parent=0 // pred_check
    _
  $region19: #{scalogram_encoder_forward.5} parent=0 // pred_check_branch
    %198 = sbr.rel (0) target = $region21
  $region20: #{scalogram_encoder_forward.5} parent=0 // pred_region
    _
  $region21: #{scalogram_encoder_forward.5} parent=0 // pred_fallthru
    _

// kernel: scalogram_encoder_forward.7
$region0: #{scalogram_encoder_forward.7}
  #allocation0 [shape = 'u32[]', space=smem, size = 0x4, offset = 0x4, fixed_abs, tag = 'smem constant byte address 0x4 - core index']
  #allocation1 [shape = 'u32[144,128]{1,0:T(1,128)}', space=vmem, size = 0x12000, scoped, tag = 'internal scratch']
  %s0 = inlined_call_operand.vmem [shape: f32[72,384], index: 0, kind: input, shape index: {}]
  %s1 = inlined_call_operand.vmem [shape: f32[8,72], index: 1, kind: input, shape index: {}]
  %s2 = inlined_call_operand.vmem [shape: f32[8,1], index: 2, kind: input, shape index: {}]
  %s3 = inlined_call_operand.vmem [shape: f32[8,384], index: 3, kind: input, shape index: {}]
  %s4 = inlined_call_operand.vmem [shape: f32[8,384], index: 4, kind: output, shape index: {}]
  %s5 = sld [smem:[#allocation0]]
  $region26: #{scalogram_encoder_forward.7} parent=0
    _
  %s7 = ssub.s32 1, %s5
  %s8 = scalar_select 0, %s7, %s5
  // Predicated region
  $region2: #{scalogram_encoder_forward.7} parent=0 // pred_check
    _
  $region3: #{scalogram_encoder_forward.7} parent=0 // pred_check_branch
    %10 = sbr.rel (0) target = $region5
  $region4: #{scalogram_encoder_forward.7} parent=0 // pred_region
    _
  $region5: #{scalogram_encoder_forward.7} parent=0 // pred_fallthru
    _
  // Predicated region
  $region6: #{scalogram_encoder_forward.7} parent=0 // pred_check
    _
  $region7: #{scalogram_encoder_forward.7} parent=0 // pred_check_branch
    %12 = sbr.rel (0) target = $region9
  $region8: #{scalogram_encoder_forward.7} parent=0 // pred_region
    _
  $region9: #{scalogram_encoder_forward.7} parent=0 // pred_fallthru
    _
  // Predicated region
  $region10: #{scalogram_encoder_forward.7} parent=0 // pred_check
    _
  $region11: #{scalogram_encoder_forward.7} parent=0 // pred_check_branch
    %14 = sbr.rel (0) target = $region13
  $region12: #{scalogram_encoder_forward.7} parent=0 // pred_region
    _
  $region13: #{scalogram_encoder_forward.7} parent=0 // pred_fallthru
    _
  // Predicated region
  $region14: #{scalogram_encoder_forward.7} parent=0 // pred_check
    _
  $region15: #{scalogram_encoder_forward.7} parent=0 // pred_check_branch
    %16 = sbr.rel (0) target = $region17
  $region16: #{scalogram_encoder_forward.7} parent=0 // pred_region
    _
  $region17: #{scalogram_encoder_forward.7} parent=0 // pred_fallthru
    _
  %v17 = vld [vmem:[%s1] sm:$0xff]
  %v18 = vld [vmem:[%s0] sm:$0xff]
  %v19 = vld [vmem:[%s0 + $0x8] sm:$0xff]
  %v20 = vld [vmem:[%s0 + $0x10] sm:$0xff]
  %v21 = vld [vmem:[%s0 + $0x18] sm:$0xff]
  %v22 = vld [vmem:[%s0 + $0x20] sm:$0xff]
  %v23 = vld [vmem:[%s0 + $0x28] sm:$0xff]
  %v24 = vld [vmem:[%s0 + $0x30] sm:$0xff]
  %v25 = vld [vmem:[%s0 + $0x38] sm:$0xff]
  %v26 = vld [vmem:[%s0 + $0x40] sm:$0xff]
  %v27 = vld [vmem:[%s0 + $0x48] sm:$0xff]
  %v28 = vld [vmem:[%s0 + $0x50] sm:$0xff]
  %v29 = vld [vmem:[%s0 + $0x58] sm:$0xff]
  %v30 = vld [vmem:[%s0 + $0x60] sm:$0xff]
  %v31 = vld [vmem:[%s0 + $0x68] sm:$0xff]
  %v32 = vld [vmem:[%s0 + $0x70] sm:$0xff]
  %v33 = vld [vmem:[%s0 + $0x78] sm:$0xff]
  %v34 = vld [vmem:[%s0 + $0x80] sm:$0xff]
  %v35 = vld [vmem:[%s0 + $0x88] sm:$0xff]
  %v36 = vld [vmem:[%s0 + $0x90] sm:$0xff]
  %v37 = vld [vmem:[%s0 + $0x98] sm:$0xff]
  %v38 = vld [vmem:[%s0 + $0xa0] sm:$0xff]
  %v39 = vld [vmem:[%s0 + $0xa8] sm:$0xff]
  %v40 = vld [vmem:[%s0 + $0xb0] sm:$0xff]
  %v41 = vld [vmem:[%s0 + $0xb8] sm:$0xff]
  %v42 = vld [vmem:[%s0 + $0xc0] sm:$0xff]
  %v43 = vld [vmem:[%s0 + $0xc8] sm:$0xff]
  %v44 = vld [vmem:[%s0 + $0xd0] sm:$0xff]
  %v45 = vld [vmem:[%s2] sm:$0xff]
  %47 = vset.pattern.permute.xlu0 0
  %48 = vperm.xlu0 %47, %v45
  %v49 = vpop.permute.xlu0 %48
  %vm51 = vcmask 588800
  %v53 = vsel %vm51, %v17, 0
  %55 = vmatprep.subr.mxu0 %v19
  %56 = vmatpush1.msra.mxu0 %v18
  %57 = vmatprep.subr.mxu0 %v22
  %58 = vmatpush1.msra.mxu0 %v21
  %59 = vmatprep.subr.mxu0 %v25
  %60 = vmatpush1.msra.mxu0 %v24
  %61 = vmatprep.subr.mxu0 %v28
  %62 = vmatpush1.msra.mxu0 %v27
  %63 = vmatprep.subr.mxu0 %v31
  %64 = vmatpush1.msra.mxu0 %v30
  %65 = vmatprep.subr.mxu0 %v34
  %66 = vmatpush1.msra.mxu0 %v33
  %67 = vmatprep.subr.mxu0 %v37
  %68 = vmatpush1.msra.mxu0 %v36
  %69 = vmatprep.subr.mxu0 %v40
  %70 = vmatpush1.msra.mxu0 %v39
  %71 = vmatprep.subr.mxu0 %v43
  %72 = vmatpush1.msra.mxu0 %v42
  %73 = vmatprep.subr.mxu0 0.0
  %74 = vmatpush1.msra.mxu0 0.0
  %75 = vmatprep.subr.mxu0 0.0
  %76 = vmatpush1.msra.mxu0 0.0
  %77 = vmatprep.subr.mxu0 0.0
  %78 = vmatpush1.msra.mxu0 0.0
  %79 = vmatprep.subr.mxu0 0.0
  %80 = vmatpush1.msra.mxu0 0.0
  %81 = vmatprep.subr.mxu0 0.0
  %82 = vmatpush1.msra.mxu0 0.0
  %83 = vmatprep.subr.mxu0 0.0
  %84 = vmatpush1.msra.mxu0 0.0
  %85 = vmatprep.subr.mxu0 0.0
  %86 = vmatpush1.msra.mxu0 0.0
  %87 = vmatprep.subr.mxu0 0.0
  %88 = vmatpush1.msra.mxu0 0.0
  %89 = vmatprep.subr.mxu0 0.0
  %90 = vmatpush1.msra.mxu0 0.0
  %91 = vmatprep.subr.mxu0 0.0
  %92 = vmatpush1.msra.mxu0 0.0
  %93 = vmatprep.subr.mxu0 0.0
  %94 = vmatpush1.msra.mxu0 0.0
  %95 = vmatprep.subr.mxu0 0.0
  %96 = vmatpush1.msra.mxu0 0.0
  %97 = vmatprep.subr.mxu0 0.0
  %98 = vmatpush1.msra.mxu0 0.0
  %99 = vmatprep.subr.mxu0 0.0
  %100 = vmatpush1.msra.mxu0 0.0
  %101 = vmatprep.subr.mxu0 0.0
  %102 = vmatpush1.msra.mxu0 0.0
  %103 = vmatprep.subr.mxu0 0.0
  %104 = vmatpush1.msra.mxu0 0.0
  %105 = vmatprep.subr.mxu0 0.0
  %106 = vmatpush1.msra.mxu0 0.0
  %107 = vmatprep.subr.mxu0 0.0
  %108 = vmatpush1.msra.mxu0 0.0
  %109 = vmatprep.subr.mxu0 0.0
  %110 = vmatpush1.msra.mxu0 0.0
  %111 = vmatprep.subr.mxu0 0.0
  %112 = vmatpush1.msra.mxu0 0.0
  %113 = vmatprep.subr.mxu0 0.0
  %114 = vmatpush1.msra.mxu0 0.0
  %115 = vmatprep.subr.mxu0 0.0
  %116 = vmatpush1.msra.mxu0 0.0
  %117 = vmatprep.subr.mxu0 0.0
  %118 = vmatpush1.msra.mxu0 0.0
  %119 = vmatprep.mubr.f32.mxu0 0.0
  %120 = vmatmul.mubr.f32.gmra.mrb[0].mxu0 %v53
  %v121 = vpop.f32.mrb[0].mxu0
  %v122 = vadd.f32 %v49, %v121
  %v123 = vpop.f32.mrb[0].mxu0
  %v124 = vadd.f32 %v49, %v123
  %125 = vdwg.mxu0
  %126 = vmatprep.subr.mxu0 0.0
  %127 = vmatpush1.msra.mxu0 %v20
  %128 = vmatprep.subr.mxu0 0.0
  %129 = vmatpush1.msra.mxu0 %v23
  %130 = vmatprep.subr.mxu0 0.0
  %131 = vmatpush1.msra.mxu0 %v26
  %132 = vmatprep.subr.mxu0 0.0
  %133 = vmatpush1.msra.mxu0 %v29
  %134 = vmatprep.subr.mxu0 0.0
  %135 = vmatpush1.msra.mxu0 %v32
  %136 = vmatprep.subr.mxu0 0.0
  %137 = vmatpush1.msra.mxu0 %v35
  %138 = vmatprep.subr.mxu0 0.0
  %139 = vmatpush1.msra.mxu0 %v38
  %140 = vmatprep.subr.mxu0 0.0
  %141 = vmatpush1.msra.mxu0 %v41
  %142 = vmatprep.subr.mxu0 0.0
  %143 = vmatpush1.msra.mxu0 %v44
  %144 = vmatprep.subr.mxu0 0.0
  %145 = vmatpush1.msra.mxu0 0.0
  %146 = vmatprep.subr.mxu0 0.0
  %147 = vmatpush1.msra.mxu0 0.0
  %148 = vmatprep.subr.mxu0 0.0
  %149 = vmatpush1.msra.mxu0 0.0
  %150 = vmatprep.subr.mxu0 0.0
  %151 = vmatpush1.msra.mxu0 0.0
  %152 = vmatprep.subr.mxu0 0.0
  %153 = vmatpush1.msra.mxu0 0.0
  %154 = vmatprep.subr.mxu0 0.0
  %155 = vmatpush1.msra.mxu0 0.0
  %156 = vmatprep.subr.mxu0 0.0
  %157 = vmatpush1.msra.mxu0 0.0
  %158 = vmatprep.subr.mxu0 0.0
  %159 = vmatpush1.msra.mxu0 0.0
  %160 = vmatprep.subr.mxu0 0.0
  %161 = vmatpush1.msra.mxu0 0.0
  %162 = vmatprep.subr.mxu0 0.0
  %163 = vmatpush1.msra.mxu0 0.0
  %164 = vmatprep.subr.mxu0 0.0
  %165 = vmatpush1.msra.mxu0 0.0
  %166 = vmatprep.subr.mxu0 0.0
  %167 = vmatpush1.msra.mxu0 0.0
  %168 = vmatprep.subr.mxu0 0.0
  %169 = vmatpush1.msra.mxu0 0.0
  %170 = vmatprep.subr.mxu0 0.0
  %171 = vmatpush1.msra.mxu0 0.0
  %172 = vmatprep.subr.mxu0 0.0
  %173 = vmatpush1.msra.mxu0 0.0
  %174 = vmatprep.subr.mxu0 0.0
  %175 = vmatpush1.msra.mxu0 0.0
  %176 = vmatprep.subr.mxu0 0.0
  %177 = vmatpush1.msra.mxu0 0.0
  %178 = vmatprep.subr.mxu0 0.0
  %179 = vmatpush1.msra.mxu0 0.0
  %180 = vmatprep.subr.mxu0 0.0
  %181 = vmatpush1.msra.mxu0 0.0
  %182 = vmatprep.subr.mxu0 0.0
  %183 = vmatpush1.msra.mxu0 0.0
  %184 = vmatprep.subr.mxu0 0.0
  %185 = vmatpush1.msra.mxu0 0.0
  %186 = vmatprep.subr.mxu0 0.0
  %187 = vmatpush1.msra.mxu0 0.0
  %188 = vmatprep.subr.mxu0 0.0
  %189 = vmatpush1.msra.mxu0 0.0
  %190 = vmatprep.mubr.f32.mxu0 0.0
  %191 = vmatmul.mubr.f32.gmra.mrb[0].mxu0 %v53
  %v192 = vpop.f32.mrb[0].mxu0
  %v193 = vadd.f32 %v49, %v192
  %v194 = vpop.f32.mrb[0].mxu0
  %195 = vdwg.mxu0
  %v196 = vmax.f32 %v122, 0.0
  %v197 = vmax.f32 %v124, 0.0
  %v198 = vmax.f32 %v193, 0.0
  %v199 = vld [vmem:[%s3] sm:$0xff]
  %v200 = vld [vmem:[%s3 + $0x8] sm:$0xff]
  %v201 = vld [vmem:[%s3 + $0x10] sm:$0xff]
  %v202 = vadd.f32 %v196, %v199
  %v203 = vadd.f32 %v197, %v200
  %v204 = vadd.f32 %v198, %v201
  %v205 = vmax.f32 %v202, 0.0
  %v206 = vmax.f32 %v203, 0.0
  %v207 = vmax.f32 %v204, 0.0
  %208 = vst [vmem:[%s4] sm:$0xff] %v205
  %209 = vst [vmem:[%s4 + $0x8] sm:$0xff] %v206
  %210 = vst [vmem:[%s4 + $0x10] sm:$0xff] %v207
  // Predicated region
  $region18: #{scalogram_encoder_forward.7} parent=0 // pred_check
    _
  $region19: #{scalogram_encoder_forward.7} parent=0 // pred_check_branch
    %212 = sbr.rel (0) target = $region21
  $region20: #{scalogram_encoder_forward.7} parent=0 // pred_region
    _
  $region21: #{scalogram_encoder_forward.7} parent=0 // pred_fallthru
    _
  // Predicated region
  $region22: #{scalogram_encoder_forward.7} parent=0 // pred_check
    _
  $region23: #{scalogram_encoder_forward.7} parent=0 // pred_check_branch
    %214 = sbr.rel (0) target = $region25
  $region24: #{scalogram_encoder_forward.7} parent=0 // pred_region
    _
  $region25: #{scalogram_encoder_forward.7} parent=0 // pred_fallthru
    _

// kernel: scalogram_encoder_forward.8
$region0: #{scalogram_encoder_forward.8}
  #allocation0 [shape = 'u32[]', space=smem, size = 0x4, offset = 0x4, fixed_abs, tag = 'smem constant byte address 0x4 - core index']
  #allocation1 [shape = 'u32[144,128]{1,0:T(1,128)}', space=vmem, size = 0x12000, scoped, tag = 'internal scratch']
  %s0 = inlined_call_operand.vmem [shape: f32[72,256], index: 0, kind: input, shape index: {}]
  %s1 = inlined_call_operand.vmem [shape: f32[8,72], index: 1, kind: input, shape index: {}]
  %s2 = inlined_call_operand.vmem [shape: f32[8,1], index: 2, kind: input, shape index: {}]
  %s3 = inlined_call_operand.vmem [shape: f32[8,256], index: 3, kind: output, shape index: {}]
  %s4 = sld [smem:[#allocation0]]
  $region22: #{scalogram_encoder_forward.8} parent=0
    _
  %s6 = ssub.s32 1, %s4
  %s7 = scalar_select 0, %s6, %s4
  // Predicated region
  $region2: #{scalogram_encoder_forward.8} parent=0 // pred_check
    _
  $region3: #{scalogram_encoder_forward.8} parent=0 // pred_check_branch
    %9 = sbr.rel (0) target = $region5
  $region4: #{scalogram_encoder_forward.8} parent=0 // pred_region
    _
  $region5: #{scalogram_encoder_forward.8} parent=0 // pred_fallthru
    _
  // Predicated region
  $region6: #{scalogram_encoder_forward.8} parent=0 // pred_check
    _
  $region7: #{scalogram_encoder_forward.8} parent=0 // pred_check_branch
    %11 = sbr.rel (0) target = $region9
  $region8: #{scalogram_encoder_forward.8} parent=0 // pred_region
    _
  $region9: #{scalogram_encoder_forward.8} parent=0 // pred_fallthru
    _
  // Predicated region
  $region10: #{scalogram_encoder_forward.8} parent=0 // pred_check
    _
  $region11: #{scalogram_encoder_forward.8} parent=0 // pred_check_branch
    %13 = sbr.rel (0) target = $region13
  $region12: #{scalogram_encoder_forward.8} parent=0 // pred_region
    _
  $region13: #{scalogram_encoder_forward.8} parent=0 // pred_fallthru
    _
  %v14 = vld [vmem:[%s1] sm:$0xff]
  %v15 = vld [vmem:[%s0] sm:$0xff]
  %v16 = vld [vmem:[%s0 + $0x8] sm:$0xff]
  %v17 = vld [vmem:[%s0 + $0x10] sm:$0xff]
  %v18 = vld [vmem:[%s0 + $0x18] sm:$0xff]
  %v19 = vld [vmem:[%s0 + $0x20] sm:$0xff]
  %v20 = vld [vmem:[%s0 + $0x28] sm:$0xff]
  %v21 = vld [vmem:[%s0 + $0x30] sm:$0xff]
  %v22 = vld [vmem:[%s0 + $0x38] sm:$0xff]
  %v23 = vld [vmem:[%s0 + $0x40] sm:$0xff]
  %v24 = vld [vmem:[%s0 + $0x48] sm:$0xff]
  %v25 = vld [vmem:[%s0 + $0x50] sm:$0xff]
  %v26 = vld [vmem:[%s0 + $0x58] sm:$0xff]
  %v27 = vld [vmem:[%s0 + $0x60] sm:$0xff]
  %v28 = vld [vmem:[%s0 + $0x68] sm:$0xff]
  %v29 = vld [vmem:[%s0 + $0x70] sm:$0xff]
  %v30 = vld [vmem:[%s0 + $0x78] sm:$0xff]
  %v31 = vld [vmem:[%s0 + $0x80] sm:$0xff]
  %v32 = vld [vmem:[%s0 + $0x88] sm:$0xff]
  %v33 = vld [vmem:[%s2] sm:$0xff]
  %35 = vset.pattern.permute.xlu0 0
  %36 = vperm.xlu0 %35, %v33
  %v37 = vpop.permute.xlu0 %36
  %vm39 = vcmask 588800
  %v41 = vsel %vm39, %v14, 0
  %43 = vmatprep.subr.mxu0 %v16
  %44 = vmatpush1.msra.mxu0 %v15
  %45 = vmatprep.subr.mxu0 %v18
  %46 = vmatpush1.msra.mxu0 %v17
  %47 = vmatprep.subr.mxu0 %v20
  %48 = vmatpush1.msra.mxu0 %v19
  %49 = vmatprep.subr.mxu0 %v22
  %50 = vmatpush1.msra.mxu0 %v21
  %51 = vmatprep.subr.mxu0 %v24
  %52 = vmatpush1.msra.mxu0 %v23
  %53 = vmatprep.subr.mxu0 %v26
  %54 = vmatpush1.msra.mxu0 %v25
  %55 = vmatprep.subr.mxu0 %v28
  %56 = vmatpush1.msra.mxu0 %v27
  %57 = vmatprep.subr.mxu0 %v30
  %58 = vmatpush1.msra.mxu0 %v29
  %59 = vmatprep.subr.mxu0 %v32
  %60 = vmatpush1.msra.mxu0 %v31
  %61 = vmatprep.subr.mxu0 0.0
  %62 = vmatpush1.msra.mxu0 0.0
  %63 = vmatprep.subr.mxu0 0.0
  %64 = vmatpush1.msra.mxu0 0.0
  %65 = vmatprep.subr.mxu0 0.0
  %66 = vmatpush1.msra.mxu0 0.0
  %67 = vmatprep.subr.mxu0 0.0
  %68 = vmatpush1.msra.mxu0 0.0
  %69 = vmatprep.subr.mxu0 0.0
  %70 = vmatpush1.msra.mxu0 0.0
  %71 = vmatprep.subr.mxu0 0.0
  %72 = vmatpush1.msra.mxu0 0.0
  %73 = vmatprep.subr.mxu0 0.0
  %74 = vmatpush1.msra.mxu0 0.0
  %75 = vmatprep.subr.mxu0 0.0
  %76 = vmatpush1.msra.mxu0 0.0
  %77 = vmatprep.subr.mxu0 0.0
  %78 = vmatpush1.msra.mxu0 0.0
  %79 = vmatprep.subr.mxu0 0.0
  %80 = vmatpush1.msra.mxu0 0.0
  %81 = vmatprep.subr.mxu0 0.0
  %82 = vmatpush1.msra.mxu0 0.0
  %83 = vmatprep.subr.mxu0 0.0
  %84 = vmatpush1.msra.mxu0 0.0
  %85 = vmatprep.subr.mxu0 0.0
  %86 = vmatpush1.msra.mxu0 0.0
  %87 = vmatprep.subr.mxu0 0.0
  %88 = vmatpush1.msra.mxu0 0.0
  %89 = vmatprep.subr.mxu0 0.0
  %90 = vmatpush1.msra.mxu0 0.0
  %91 = vmatprep.subr.mxu0 0.0
  %92 = vmatpush1.msra.mxu0 0.0
  %93 = vmatprep.subr.mxu0 0.0
  %94 = vmatpush1.msra.mxu0 0.0
  %95 = vmatprep.subr.mxu0 0.0
  %96 = vmatpush1.msra.mxu0 0.0
  %97 = vmatprep.subr.mxu0 0.0
  %98 = vmatpush1.msra.mxu0 0.0
  %99 = vmatprep.subr.mxu0 0.0
  %100 = vmatpush1.msra.mxu0 0.0
  %101 = vmatprep.subr.mxu0 0.0
  %102 = vmatpush1.msra.mxu0 0.0
  %103 = vmatprep.subr.mxu0 0.0
  %104 = vmatpush1.msra.mxu0 0.0
  %105 = vmatprep.subr.mxu0 0.0
  %106 = vmatpush1.msra.mxu0 0.0
  %107 = vmatprep.mubr.f32.mxu0 0.0
  %108 = vmatmul.mubr.f32.gmra.mrb[0].mxu0 %v41
  %v109 = vpop.f32.mrb[0].mxu0
  %v110 = vadd.f32 %v37, %v109
  %v111 = vpop.f32.mrb[0].mxu0
  %v112 = vadd.f32 %v37, %v111
  %113 = vdwg.mxu0
  %v114 = vmax.f32 %v110, 0.0
  %v115 = vmax.f32 %v112, 0.0
  %116 = vst [vmem:[%s3] sm:$0xff] %v114
  %117 = vst [vmem:[%s3 + $0x8] sm:$0xff] %v115
  // Predicated region
  $region14: #{scalogram_encoder_forward.8} parent=0 // pred_check
    _
  $region15: #{scalogram_encoder_forward.8} parent=0 // pred_check_branch
    %119 = sbr.rel (0) target = $region17
  $region16: #{scalogram_encoder_forward.8} parent=0 // pred_region
    _
  $region17: #{scalogram_encoder_forward.8} parent=0 // pred_fallthru
    _
  // Predicated region
  $region18: #{scalogram_encoder_forward.8} parent=0 // pred_check
    _
  $region19: #{scalogram_encoder_forward.8} parent=0 // pred_check_branch
    %121 = sbr.rel (0) target = $region21
  $region20: #{scalogram_encoder_forward.8} parent=0 // pred_region
    _
  $region21: #{scalogram_encoder_forward.8} parent=0 // pred_fallthru
    _

// kernel: scalogram_encoder_forward.9
$region0: #{scalogram_encoder_forward.9}
  #allocation0 [shape = 'u32[]', space=smem, size = 0x4, offset = 0x4, fixed_abs, tag = 'smem constant byte address 0x4 - core index']
  #allocation1 [shape = 'u32[144,128]{1,0:T(1,128)}', space=vmem, size = 0x12000, scoped, tag = 'internal scratch']
  %s0 = inlined_call_operand.vmem [shape: f32[72,256], index: 0, kind: input, shape index: {}]
  %s1 = inlined_call_operand.vmem [shape: f32[8,72], index: 1, kind: input, shape index: {}]
  %s2 = inlined_call_operand.vmem [shape: f32[8,1], index: 2, kind: input, shape index: {}]
  %s3 = inlined_call_operand.vmem [shape: f32[8,256], index: 3, kind: input, shape index: {}]
  %s4 = inlined_call_operand.vmem [shape: f32[8,256], index: 4, kind: output, shape index: {}]
  %s5 = sld [smem:[#allocation0]]
  $region26: #{scalogram_encoder_forward.9} parent=0
    _
  %s7 = ssub.s32 1, %s5
  %s8 = scalar_select 0, %s7, %s5
  // Predicated region
  $region2: #{scalogram_encoder_forward.9} parent=0 // pred_check
    _
  $region3: #{scalogram_encoder_forward.9} parent=0 // pred_check_branch
    %10 = sbr.rel (0) target = $region5
  $region4: #{scalogram_encoder_forward.9} parent=0 // pred_region
    _
  $region5: #{scalogram_encoder_forward.9} parent=0 // pred_fallthru
    _
  // Predicated region
  $region6: #{scalogram_encoder_forward.9} parent=0 // pred_check
    _
  $region7: #{scalogram_encoder_forward.9} parent=0 // pred_check_branch
    %12 = sbr.rel (0) target = $region9
  $region8: #{scalogram_encoder_forward.9} parent=0 // pred_region
    _
  $region9: #{scalogram_encoder_forward.9} parent=0 // pred_fallthru
    _
  // Predicated region
  $region10: #{scalogram_encoder_forward.9} parent=0 // pred_check
    _
  $region11: #{scalogram_encoder_forward.9} parent=0 // pred_check_branch
    %14 = sbr.rel (0) target = $region13
  $region12: #{scalogram_encoder_forward.9} parent=0 // pred_region
    _
  $region13: #{scalogram_encoder_forward.9} parent=0 // pred_fallthru
    _
  // Predicated region
  $region14: #{scalogram_encoder_forward.9} parent=0 // pred_check
    _
  $region15: #{scalogram_encoder_forward.9} parent=0 // pred_check_branch
    %16 = sbr.rel (0) target = $region17
  $region16: #{scalogram_encoder_forward.9} parent=0 // pred_region
    _
  $region17: #{scalogram_encoder_forward.9} parent=0 // pred_fallthru
    _
  %v17 = vld [vmem:[%s1] sm:$0xff]
  %v18 = vld [vmem:[%s0] sm:$0xff]
  %v19 = vld [vmem:[%s0 + $0x8] sm:$0xff]
  %v20 = vld [vmem:[%s0 + $0x10] sm:$0xff]
  %v21 = vld [vmem:[%s0 + $0x18] sm:$0xff]
  %v22 = vld [vmem:[%s0 + $0x20] sm:$0xff]
  %v23 = vld [vmem:[%s0 + $0x28] sm:$0xff]
  %v24 = vld [vmem:[%s0 + $0x30] sm:$0xff]
  %v25 = vld [vmem:[%s0 + $0x38] sm:$0xff]
  %v26 = vld [vmem:[%s0 + $0x40] sm:$0xff]
  %v27 = vld [vmem:[%s0 + $0x48] sm:$0xff]
  %v28 = vld [vmem:[%s0 + $0x50] sm:$0xff]
  %v29 = vld [vmem:[%s0 + $0x58] sm:$0xff]
  %v30 = vld [vmem:[%s0 + $0x60] sm:$0xff]
  %v31 = vld [vmem:[%s0 + $0x68] sm:$0xff]
  %v32 = vld [vmem:[%s0 + $0x70] sm:$0xff]
  %v33 = vld [vmem:[%s0 + $0x78] sm:$0xff]
  %v34 = vld [vmem:[%s0 + $0x80] sm:$0xff]
  %v35 = vld [vmem:[%s0 + $0x88] sm:$0xff]
  %v36 = vld [vmem:[%s2] sm:$0xff]
  %38 = vset.pattern.permute.xlu0 0
  %39 = vperm.xlu0 %38, %v36
  %v40 = vpop.permute.xlu0 %39
  %vm42 = vcmask 588800
  %v44 = vsel %vm42, %v17, 0
  %46 = vmatprep.subr.mxu0 %v19
  %47 = vmatpush1.msra.mxu0 %v18
  %48 = vmatprep.subr.mxu0 %v21
  %49 = vmatpush1.msra.mxu0 %v20
  %50 = vmatprep.subr.mxu0 %v23
  %51 = vmatpush1.msra.mxu0 %v22
  %52 = vmatprep.subr.mxu0 %v25
  %53 = vmatpush1.msra.mxu0 %v24
  %54 = vmatprep.subr.mxu0 %v27
  %55 = vmatpush1.msra.mxu0 %v26
  %56 = vmatprep.subr.mxu0 %v29
  %57 = vmatpush1.msra.mxu0 %v28
  %58 = vmatprep.subr.mxu0 %v31
  %59 = vmatpush1.msra.mxu0 %v30
  %60 = vmatprep.subr.mxu0 %v33
  %61 = vmatpush1.msra.mxu0 %v32
  %62 = vmatprep.subr.mxu0 %v35
  %63 = vmatpush1.msra.mxu0 %v34
  %64 = vmatprep.subr.mxu0 0.0
  %65 = vmatpush1.msra.mxu0 0.0
  %66 = vmatprep.subr.mxu0 0.0
  %67 = vmatpush1.msra.mxu0 0.0
  %68 = vmatprep.subr.mxu0 0.0
  %69 = vmatpush1.msra.mxu0 0.0
  %70 = vmatprep.subr.mxu0 0.0
  %71 = vmatpush1.msra.mxu0 0.0
  %72 = vmatprep.subr.mxu0 0.0
  %73 = vmatpush1.msra.mxu0 0.0
  %74 = vmatprep.subr.mxu0 0.0
  %75 = vmatpush1.msra.mxu0 0.0
  %76 = vmatprep.subr.mxu0 0.0
  %77 = vmatpush1.msra.mxu0 0.0
  %78 = vmatprep.subr.mxu0 0.0
  %79 = vmatpush1.msra.mxu0 0.0
  %80 = vmatprep.subr.mxu0 0.0
  %81 = vmatpush1.msra.mxu0 0.0
  %82 = vmatprep.subr.mxu0 0.0
  %83 = vmatpush1.msra.mxu0 0.0
  %84 = vmatprep.subr.mxu0 0.0
  %85 = vmatpush1.msra.mxu0 0.0
  %86 = vmatprep.subr.mxu0 0.0
  %87 = vmatpush1.msra.mxu0 0.0
  %88 = vmatprep.subr.mxu0 0.0
  %89 = vmatpush1.msra.mxu0 0.0
  %90 = vmatprep.subr.mxu0 0.0
  %91 = vmatpush1.msra.mxu0 0.0
  %92 = vmatprep.subr.mxu0 0.0
  %93 = vmatpush1.msra.mxu0 0.0
  %94 = vmatprep.subr.mxu0 0.0
  %95 = vmatpush1.msra.mxu0 0.0
  %96 = vmatprep.subr.mxu0 0.0
  %97 = vmatpush1.msra.mxu0 0.0
  %98 = vmatprep.subr.mxu0 0.0
  %99 = vmatpush1.msra.mxu0 0.0
  %100 = vmatprep.subr.mxu0 0.0
  %101 = vmatpush1.msra.mxu0 0.0
  %102 = vmatprep.subr.mxu0 0.0
  %103 = vmatpush1.msra.mxu0 0.0
  %104 = vmatprep.subr.mxu0 0.0
  %105 = vmatpush1.msra.mxu0 0.0
  %106 = vmatprep.subr.mxu0 0.0
  %107 = vmatpush1.msra.mxu0 0.0
  %108 = vmatprep.subr.mxu0 0.0
  %109 = vmatpush1.msra.mxu0 0.0
  %110 = vmatprep.mubr.f32.mxu0 0.0
  %111 = vmatmul.mubr.f32.gmra.mrb[0].mxu0 %v44
  %v112 = vpop.f32.mrb[0].mxu0
  %v113 = vadd.f32 %v40, %v112
  %v114 = vpop.f32.mrb[0].mxu0
  %v115 = vadd.f32 %v40, %v114
  %116 = vdwg.mxu0
  %v117 = vmax.f32 %v113, 0.0
  %v118 = vmax.f32 %v115, 0.0
  %v119 = vld [vmem:[%s3] sm:$0xff]
  %v120 = vld [vmem:[%s3 + $0x8] sm:$0xff]
  %v121 = vadd.f32 %v117, %v119
  %v122 = vadd.f32 %v118, %v120
  %123 = vst [vmem:[%s4] sm:$0xff] %v121
  %124 = vst [vmem:[%s4 + $0x8] sm:$0xff] %v122
  // Predicated region
  $region18: #{scalogram_encoder_forward.9} parent=0 // pred_check
    _
  $region19: #{scalogram_encoder_forward.9} parent=0 // pred_check_branch
    %126 = sbr.rel (0) target = $region21
  $region20: #{scalogram_encoder_forward.9} parent=0 // pred_region
    _
  $region21: #{scalogram_encoder_forward.9} parent=0 // pred_fallthru
    _
  // Predicated region
  $region22: #{scalogram_encoder_forward.9} parent=0 // pred_check
    _
  $region23: #{scalogram_encoder_forward.9} parent=0 // pred_check_branch
    %128 = sbr.rel (0) target = $region25
  $region24: #{scalogram_encoder_forward.9} parent=0 // pred_region
    _
  $region25: #{scalogram_encoder_forward.9} parent=0 // pred_fallthru
    _

</llo_original>
